<compile_context>
chip_gen: v6e
topology: v6e:2x2x1
jax: 0.10.0
libtpu: 0.0.40
codegen_flags: <defaults>
</compile_context>

<pallas_src>
import jax
import jax.numpy as jnp
from jax.experimental import pallas as pl
from jax.experimental.pallas import tpu as pltpu


def se_scale_kernel(x_ref, w_ref, b_ref, s_ref, o_ref):
    """(1,Cin)@(Cin,Cout) -> +bias -> hardsigmoid -> broadcast-mul over rows."""
    # MXU matvec with f32 accumulation regardless of input dtype.
    y = jnp.dot(x_ref[...], w_ref[...], preferred_element_type=jnp.float32)
    y = y + b_ref[...].astype(jnp.float32)
    # PyTorch Hardsigmoid: clip(x / 6 + 0.5, 0, 1)
    hs = jnp.clip(y * (1.0 / 6.0) + 0.5, 0.0, 1.0)
    s = s_ref[...]
    # hs is (1, Cout): broadcasts over the sublane (spatial) axis.
    o_ref[...] = (s * hs.astype(s.dtype)).astype(o_ref.dtype)


def _tensorcores_per_chip():
    """2 on v7x (2 TCs/chip), 1 on v5e/v6e; conservative fallback of 1."""
    try:
        kind = getattr(jax.devices()[0], "device_kind", "") or ""
        if "v7" in kind.lower():
            return 2
    except Exception:
        pass
    return 1


def se_conv_hardsigmoid_mul(x116, x113, weight, bias):
    """x116: (1,Cin,1,1); x113: (1,Cout,H,W); weight: (Cout,Cin,1,1); bias: (Cout,)."""
    n, cin, _, _ = x116.shape
    _, cout, h, w = x113.shape
    assert n == 1 and x113.shape[0] == 1
    hw = h * w
    dt = x113.dtype

    # Keep native dtype; only reshape/transpose (layout plumbing, no casts).
    x_row = x116.reshape(1, cin)                 # (1, Cin)
    w_t = weight.reshape(cout, cin).T            # (Cin, Cout)
    b_row = bias.reshape(1, cout)                # (1, Cout)
    s_t = x113.reshape(cout, hw).T               # (H*W, Cout)  lane-dense layout

    itemsize = jnp.dtype(dt).itemsize
    cost = pl.CostEstimate(
        flops=2 * cout * cin + 2 * cout * hw,
        transcendentals=0,
        bytes_accessed=(cin + cin * cout + cout + 2 * cout * hw) * itemsize,
    )

    if _tensorcores_per_chip() >= 2:
        # 2-way split over the spatial (sublane) axis; each TC handles half.
        rows_per_block = (((hw + 1) // 2 + 7) // 8) * 8   # sublane-aligned half
        grid = (pl.cdiv(hw, rows_per_block),)
        out_t = pl.pallas_call(
            se_scale_kernel,
            out_shape=jax.ShapeDtypeStruct((hw, cout), dt),
            grid=grid,
            in_specs=[
                pl.BlockSpec((1, cin), lambda i: (0, 0)),
                pl.BlockSpec((cin, cout), lambda i: (0, 0)),
                pl.BlockSpec((1, cout), lambda i: (0, 0)),
                pl.BlockSpec((rows_per_block, cout), lambda i: (i, 0)),
            ],
            out_specs=pl.BlockSpec((rows_per_block, cout), lambda i: (i, 0)),
            input_output_aliases={3: 0},
            compiler_params=pltpu.CompilerParams(
                dimension_semantics=("parallel",)),
            cost_estimate=cost,
        )(x_row, w_t, b_row, s_t)
    else:
        # Single TensorCore: gridless call, whole problem resident in VMEM
        # (~1.2 MB footprint, far under the VMEM limit).
        out_t = pl.pallas_call(
            se_scale_kernel,
            out_shape=jax.ShapeDtypeStruct((hw, cout), dt),
            in_specs=[pl.BlockSpec(memory_space=pltpu.VMEM)] * 4,
            out_specs=pl.BlockSpec(memory_space=pltpu.VMEM),
            input_output_aliases={3: 0},
            cost_estimate=cost,
        )(x_row, w_t, b_row, s_t)

    # Back to NCHW.
    return out_t.T.reshape(1, cout, h, w)

# TODO(synk): ideally this SE-scale should be fused into the producer of x113
# (or its consumer) to avoid the standalone 2x ~376 KB HBM round trip entirely.


if __name__ == "__main__":
    key = jax.random.PRNGKey(0)
    k1, k2, k3, k4 = jax.random.split(key, 4)

    CIN, COUT, H, W = 120, 480, 14, 14

    # deterministic synthetic parameters (Conv2d(120, 480, 1) shapes)
    weight = jax.random.normal(k1, (COUT, CIN, 1, 1), dtype=jnp.float32) * 0.05
    bias = jax.random.normal(k2, (COUT,), dtype=jnp.float32) * 0.05

    # inputs
    x116 = jax.random.normal(k3, (1, CIN, 1, 1), dtype=jnp.float32)
    x113 = jax.random.normal(k4, (1, COUT, H, W), dtype=jnp.float32)

    out = se_conv_hardsigmoid_mul(x116, x113, weight, bias)
    out = jax.block_until_ready(out)

    # reference check in plain JAX
    y_ref = (weight.reshape(COUT, CIN) @ x116.reshape(CIN, 1)).reshape(COUT) + bias
    hs_ref = jnp.clip(y_ref / 6.0 + 0.5, 0.0, 1.0)
    ref = x113 * hs_ref.reshape(1, COUT, 1, 1)
    assert out.shape == (1, COUT, H, W)
    assert jnp.allclose(out, ref, atol=1e-5, rtol=1e-5)

    print("KERNEL_OK")
</pallas_src>

<mosaic_0001>
module attributes {stable_mosaic.version = 11 : i64} {
  func.func @se_scale_kernel(%arg0: memref<1x120xf32, #tpu.memory_space<vmem>>, %arg1: memref<120x480xf32, #tpu.memory_space<vmem>>, %arg2: memref<1x480xf32, #tpu.memory_space<vmem>>, %arg3: memref<196x480xf32, #tpu.memory_space<vmem>>, %arg4: memref<196x480xf32, #tpu.memory_space<vmem>>) attributes {dimension_semantics = [], scalar_prefetch = 0 : i64, scratch_operands = 0 : i64, tpu.core_type = #tpu.core_type<tc>} {
    %c0 = arith.constant 0 : index
    %c0_0 = arith.constant 0 : index
    %0 = vector.load %arg0[%c0, %c0_0] : memref<1x120xf32, #tpu.memory_space<vmem>>, vector<1x120xf32>
    %c0_1 = arith.constant 0 : index
    %c0_2 = arith.constant 0 : index
    %1 = vector.load %arg1[%c0_1, %c0_2] : memref<120x480xf32, #tpu.memory_space<vmem>>, vector<120x480xf32>
    %cst = arith.constant dense<0.000000e+00> : vector<1x480xf32>
    %2 = tpu.matmul %0, %1, %cst {dimension_numbers = #tpu.dot_dimension_numbers<[1], [0], [0], [1], [0, 0, 1, 1], [], []>} : vector<1x120xf32>, vector<120x480xf32>, vector<1x480xf32> -> vector<1x480xf32>
    %c0_3 = arith.constant 0 : index
    %c0_4 = arith.constant 0 : index
    %3 = vector.load %arg2[%c0_3, %c0_4] : memref<1x480xf32, #tpu.memory_space<vmem>>, vector<1x480xf32>
    %4 = arith.addf %2, %3 : vector<1x480xf32>
    %cst_5 = arith.constant 0.166666672 : f32
    %5 = vector.broadcast %cst_5 : f32 to vector<1x480xf32>
    %6 = arith.mulf %4, %5 : vector<1x480xf32>
    %cst_6 = arith.constant 5.000000e-01 : f32
    %7 = vector.broadcast %cst_6 : f32 to vector<1x480xf32>
    %8 = arith.addf %6, %7 : vector<1x480xf32>
    %cst_7 = arith.constant 0.000000e+00 : f32
    %cst_8 = arith.constant 1.000000e+00 : f32
    %9 = vector.broadcast %cst_7 : f32 to vector<1x480xf32>
    %10 = arith.maximumf %9, %8 : vector<1x480xf32>
    %11 = vector.broadcast %cst_8 : f32 to vector<1x480xf32>
    %12 = arith.minimumf %11, %10 : vector<1x480xf32>
    %c0_9 = arith.constant 0 : index
    %c0_10 = arith.constant 0 : index
    %13 = vector.load %arg3[%c0_9, %c0_10] : memref<196x480xf32, #tpu.memory_space<vmem>>, vector<196x480xf32>
    %14 = vector.broadcast %12 : vector<1x480xf32> to vector<196x480xf32>
    %15 = arith.mulf %13, %14 : vector<196x480xf32>
    %c0_11 = arith.constant 0 : index
    %c0_12 = arith.constant 0 : index
    %16 = vector.load %arg4[%c0_11, %c0_12] : memref<196x480xf32, #tpu.memory_space<vmem>>, vector<196x480xf32>
    tpu.vector_store %arg4[%c0_11, %c0_12], %15 {strides = array<i32>} : memref<196x480xf32, #tpu.memory_space<vmem>>, vector<196x480xf32>,
    return
  }
}

</mosaic_0001>

<llo_original>
// kernel: tpu_custom_call.1
$region0: #{tpu_custom_call.1}
  #allocation0 [shape = 'u32[]', space=smem, size = 0x4, offset = 0x4, fixed_abs, tag = 'smem constant byte address 0x4 - core index']
  #allocation1 [shape = 'u32[144,128]{1,0:T(1,128)}', space=vmem, size = 0x12000, scoped, tag = 'internal scratch']
  %s0 = inlined_call_operand.vmem [shape: f32[1,120], index: 0, kind: input, shape index: {}]
  %s1 = inlined_call_operand.vmem [shape: f32[120,480], index: 1, kind: input, shape index: {}]
  %s2 = inlined_call_operand.vmem [shape: f32[1,480], index: 2, kind: input, shape index: {}]
  %s3 = inlined_call_operand.hbm [shape: f32[196,480], index: 3, kind: input, shape index: {}, may-alias: {3,4}]
  %s4 = inlined_call_operand.hbm [shape: f32[196,480], index: 4, kind: output, shape index: {}, may-alias: {3,4}]
  %s5 = sld [smem:[#allocation0]]
  $region30: #{tpu_custom_call.1} parent=0
    _
  %s7 = ssub.s32 1, %s5
  %s8 = scalar_select 0, %s7, %s5
  $region1: #{tpu_custom_call.1} parent=0
    #allocation2 [shape = 'u8[409600]{0}', space=vmem, size = 0x64000, scoped, tag = 'input window, operand 3, single buffered']
    #allocation3 [shape = 's32[1]{0}', space=sflag, size = 0x4, scoped, tag = 'scoped memory for tpu_custom_call.1']
    #allocation4 [shape = 's32[1]{0}', space=sflag, size = 0x4, scoped, tag = 'scoped memory for tpu_custom_call.1']
    #allocation5 [shape = 'u8[409600]{0}', space=vmem, size = 0x64000, scoped, tag = 'output window, operand 0, single buffered']
    %9 = vsyncpa [#allocation3], 0
    %10 = vsyncpa [#allocation4], 0
    // Predicated region
    $region2: #{tpu_custom_call.1} parent=1 // pred_check
      _
    $region3: #{tpu_custom_call.1} parent=1 // pred_check_branch
      %12 = sbr.rel (0) target = $region5
    $region4: #{tpu_custom_call.1} parent=1 // pred_region
      _
    $region5: #{tpu_custom_call.1} parent=1 // pred_fallthru
      _
    // Predicated region
    $region6: #{tpu_custom_call.1} parent=1 // pred_check
      _
    $region7: #{tpu_custom_call.1} parent=1 // pred_check_branch
      %14 = sbr.rel (0) target = $region9
    $region8: #{tpu_custom_call.1} parent=1 // pred_region
      _
    $region9: #{tpu_custom_call.1} parent=1 // pred_fallthru
      _
    // Predicated region
    $region10: #{tpu_custom_call.1} parent=1 // pred_check
      _
    $region11: #{tpu_custom_call.1} parent=1 // pred_check_branch
      %16 = sbr.rel (0) target = $region13
    $region12: #{tpu_custom_call.1} parent=1 // pred_region
      _
    $region13: #{tpu_custom_call.1} parent=1 // pred_fallthru
      _
    // Predicated region
    $region14: #{tpu_custom_call.1} parent=1 // pred_check
      _
    $region15: #{tpu_custom_call.1} parent=1 // pred_check_branch
      %18 = sbr.rel (0) target = $region17
    $region16: #{tpu_custom_call.1} parent=1 // pred_region
      %s20 = ssub.s32 12800, 12800
      %21 = vsyncadd [#allocation3], %s20
      %s22 = sshll.u32 [#allocation2], 4
      %s23 = int_to_ptr.vmem [resolvable:$true] %s22
      %28 = dma.hbm_to_vmem [thread:$0]  %s3, 12800, %s23, [#allocation3], 512, 512, 32
    $region17: #{tpu_custom_call.1} parent=1 // pred_fallthru
      _
    // Predicated region
    $region18: #{tpu_custom_call.1} parent=1 // pred_check
      _
    $region19: #{tpu_custom_call.1} parent=1 // pred_check_branch
      %30 = sbr.rel (0) target = $region21
    $region20: #{tpu_custom_call.1} parent=1 // pred_region
      %31 = dma.done [#allocation3], 12800
    $region21: #{tpu_custom_call.1} parent=1 // pred_fallthru
      _
    %v32 = vld [vmem:[%s0] sm:$0x1]
    %v33 = vld [vmem:[%s1] sm:$0xff]
    %v34 = vld [vmem:[%s1 + $0x8] sm:$0xff]
    %v35 = vld [vmem:[%s1 + $0x10] sm:$0xff]
    %v36 = vld [vmem:[%s1 + $0x18] sm:$0xff]
    %v37 = vld [vmem:[%s1 + $0x20] sm:$0xff]
    %v38 = vld [vmem:[%s1 + $0x28] sm:$0xff]
    %v39 = vld [vmem:[%s1 + $0x30] sm:$0xff]
    %v40 = vld [vmem:[%s1 + $0x38] sm:$0xff]
    %v41 = vld [vmem:[%s1 + $0x40] sm:$0xff]
    %v42 = vld [vmem:[%s1 + $0x48] sm:$0xff]
    %v43 = vld [vmem:[%s1 + $0x50] sm:$0xff]
    %v44 = vld [vmem:[%s1 + $0x58] sm:$0xff]
    %v45 = vld [vmem:[%s1 + $0x60] sm:$0xff]
    %v46 = vld [vmem:[%s1 + $0x68] sm:$0xff]
    %v47 = vld [vmem:[%s1 + $0x70] sm:$0xff]
    %v48 = vld [vmem:[%s1 + $0x78] sm:$0xff]
    %v49 = vld [vmem:[%s1 + $0x80] sm:$0xff]
    %v50 = vld [vmem:[%s1 + $0x88] sm:$0xff]
    %v51 = vld [vmem:[%s1 + $0x90] sm:$0xff]
    %v52 = vld [vmem:[%s1 + $0x98] sm:$0xff]
    %v53 = vld [vmem:[%s1 + $0xa0] sm:$0xff]
    %v54 = vld [vmem:[%s1 + $0xa8] sm:$0xff]
    %v55 = vld [vmem:[%s1 + $0xb0] sm:$0xff]
    %v56 = vld [vmem:[%s1 + $0xb8] sm:$0xff]
    %v57 = vld [vmem:[%s1 + $0xc0] sm:$0xff]
    %v58 = vld [vmem:[%s1 + $0xc8] sm:$0xff]
    %v59 = vld [vmem:[%s1 + $0xd0] sm:$0xff]
    %v60 = vld [vmem:[%s1 + $0xd8] sm:$0xff]
    %v61 = vld [vmem:[%s1 + $0xe0] sm:$0xff]
    %v62 = vld [vmem:[%s1 + $0xe8] sm:$0xff]
    %v63 = vld [vmem:[%s1 + $0xf0] sm:$0xff]
    %v64 = vld [vmem:[%s1 + $0xf8] sm:$0xff]
    %v65 = vld [vmem:[%s1 + $0x100] sm:$0xff]
    %v66 = vld [vmem:[%s1 + $0x108] sm:$0xff]
    %v67 = vld [vmem:[%s1 + $0x110] sm:$0xff]
    %v68 = vld [vmem:[%s1 + $0x118] sm:$0xff]
    %v69 = vld [vmem:[%s1 + $0x120] sm:$0xff]
    %v70 = vld [vmem:[%s1 + $0x128] sm:$0xff]
    %v71 = vld [vmem:[%s1 + $0x130] sm:$0xff]
    %v72 = vld [vmem:[%s1 + $0x138] sm:$0xff]
    %v73 = vld [vmem:[%s1 + $0x140] sm:$0xff]
    %v74 = vld [vmem:[%s1 + $0x148] sm:$0xff]
    %v75 = vld [vmem:[%s1 + $0x150] sm:$0xff]
    %v76 = vld [vmem:[%s1 + $0x158] sm:$0xff]
    %v77 = vld [vmem:[%s1 + $0x160] sm:$0xff]
    %v78 = vld [vmem:[%s1 + $0x168] sm:$0xff]
    %v79 = vld [vmem:[%s1 + $0x170] sm:$0xff]
    %v80 = vld [vmem:[%s1 + $0x178] sm:$0xff]
    %v81 = vld [vmem:[%s1 + $0x180] sm:$0xff]
    %v82 = vld [vmem:[%s1 + $0x188] sm:$0xff]
    %v83 = vld [vmem:[%s1 + $0x190] sm:$0xff]
    %v84 = vld [vmem:[%s1 + $0x198] sm:$0xff]
    %v85 = vld [vmem:[%s1 + $0x1a0] sm:$0xff]
    %v86 = vld [vmem:[%s1 + $0x1a8] sm:$0xff]
    %v87 = vld [vmem:[%s1 + $0x1b0] sm:$0xff]
    %v88 = vld [vmem:[%s1 + $0x1b8] sm:$0xff]
    %v89 = vld [vmem:[%s1 + $0x1c0] sm:$0xff]
    %v90 = vld [vmem:[%s1 + $0x1c8] sm:$0xff]
    %v91 = vld [vmem:[%s1 + $0x1d0] sm:$0xff]
    %v92 = vld [vmem:[%s1 + $0x1d8] sm:$0xff]
    %v93 = vld [vmem:[%s2] sm:$0xf]
    %v95 = vlaneseq
    %v96 = vshrl.u32 %v95, 7
    %v97 = vsub.s32 0, %v96
    %v98 = vrot.slane %v93, %v97
    %v99 = vlaneseq
    %v100 = vshrl.u32 %v99, 7
    %v101 = vsub.s32 1, %v100
    %v102 = vrot.slane %v93, %v101
    %v103 = vlaneseq
    %v104 = vshrl.u32 %v103, 7
    %v105 = vsub.s32 2, %v104
    %v106 = vrot.slane %v93, %v105
    %v107 = vlaneseq
    %v108 = vshrl.u32 %v107, 7
    %v109 = vsub.s32 3, %v108
    %v110 = vrot.slane %v93, %v109
    %vm115 = vcmask 982016
    %v117 = vsel %vm115, %v32, 0
    %119 = vmatprep.subr.mxu0 0.0
    %120 = vmatpush1.msra.mxu0 0.0
    %121 = vmatprep.subr.mxu0 %v90
    %122 = vmatpush1.msra.mxu0 %v89
    %123 = vmatprep.subr.mxu0 %v86
    %124 = vmatpush1.msra.mxu0 %v85
    %125 = vmatprep.subr.mxu0 %v82
    %126 = vmatpush1.msra.mxu0 %v81
    %127 = vmatprep.subr.mxu0 %v78
    %128 = vmatpush1.msra.mxu0 %v77
    %129 = vmatprep.subr.mxu0 %v74
    %130 = vmatpush1.msra.mxu0 %v73
    %131 = vmatprep.subr.mxu0 %v70
    %132 = vmatpush1.msra.mxu0 %v69
    %133 = vmatprep.subr.mxu0 %v66
    %134 = vmatpush1.msra.mxu0 %v65
    %135 = vmatprep.subr.mxu0 %v62
    %136 = vmatpush1.msra.mxu0 %v61
    %137 = vmatprep.subr.mxu0 %v58
    %138 = vmatpush1.msra.mxu0 %v57
    %139 = vmatprep.subr.mxu0 %v54
    %140 = vmatpush1.msra.mxu0 %v53
    %141 = vmatprep.subr.mxu0 %v50
    %142 = vmatpush1.msra.mxu0 %v49
    %143 = vmatprep.subr.mxu0 %v46
    %144 = vmatpush1.msra.mxu0 %v45
    %145 = vmatprep.subr.mxu0 %v42
    %146 = vmatpush1.msra.mxu0 %v41
    %147 = vmatprep.subr.mxu0 %v38
    %148 = vmatpush1.msra.mxu0 %v37
    %149 = vmatprep.subr.mxu0 %v34
    %150 = vmatpush1.msra.mxu0 %v33
    %151 = vmatprep.subr.mxu0 0.0
    %152 = vmatpush2.msra.mxu0 0.0
    %153 = vmatprep.subr.mxu0 0.0
    %154 = vmatpush2.msra.mxu0 0.0
    %155 = vmatprep.subr.mxu0 0.0
    %156 = vmatpush2.msra.mxu0 0.0
    %157 = vmatprep.subr.mxu0 0.0
    %158 = vmatpush2.msra.mxu0 0.0
    %159 = vmatprep.subr.mxu0 0.0
    %160 = vmatpush2.msra.mxu0 0.0
    %161 = vmatprep.subr.mxu0 0.0
    %162 = vmatpush2.msra.mxu0 0.0
    %163 = vmatprep.subr.mxu0 0.0
    %164 = vmatpush2.msra.mxu0 0.0
    %165 = vmatprep.subr.mxu0 0.0
    %166 = vmatpush2.msra.mxu0 0.0
    %167 = vmatprep.subr.mxu0 0.0
    %168 = vmatpush2.msra.mxu0 0.0
    %169 = vmatprep.subr.mxu0 0.0
    %170 = vmatpush2.msra.mxu0 0.0
    %171 = vmatprep.subr.mxu0 0.0
    %172 = vmatpush2.msra.mxu0 0.0
    %173 = vmatprep.subr.mxu0 0.0
    %174 = vmatpush2.msra.mxu0 0.0
    %175 = vmatprep.subr.mxu0 0.0
    %176 = vmatpush2.msra.mxu0 0.0
    %177 = vmatprep.subr.mxu0 0.0
    %178 = vmatpush2.msra.mxu0 0.0
    %179 = vmatprep.subr.mxu0 0.0
    %180 = vmatpush2.msra.mxu0 0.0
    %181 = vmatprep.subr.mxu0 0.0
    %182 = vmatpush2.msra.mxu0 0.0
    %183 = vmatprep.mubr.f32.mxu0 0.0
    %184 = vmatmul.mubr.f32.gmra.mxu0 %v117
    %v185 = vpop.f32.mrf.mxu0
    %v186 = vadd.f32 %v98, %v185
    %v187 = vpop.f32.mrf.mxu0
    %v188 = vadd.f32 %v102, %v187
    %189 = vdwg.mxu0
    %190 = vmatprep.subr.mxu0 0.0
    %191 = vmatpush1.msra.mxu0 0.0
    %192 = vmatprep.subr.mxu0 %v92
    %193 = vmatpush1.msra.mxu0 %v91
    %194 = vmatprep.subr.mxu0 %v88
    %195 = vmatpush1.msra.mxu0 %v87
    %196 = vmatprep.subr.mxu0 %v84
    %197 = vmatpush1.msra.mxu0 %v83
    %198 = vmatprep.subr.mxu0 %v80
    %199 = vmatpush1.msra.mxu0 %v79
    %200 = vmatprep.subr.mxu0 %v76
    %201 = vmatpush1.msra.mxu0 %v75
    %202 = vmatprep.subr.mxu0 %v72
    %203 = vmatpush1.msra.mxu0 %v71
    %204 = vmatprep.subr.mxu0 %v68
    %205 = vmatpush1.msra.mxu0 %v67
    %206 = vmatprep.subr.mxu0 %v64
    %207 = vmatpush1.msra.mxu0 %v63
    %208 = vmatprep.subr.mxu0 %v60
    %209 = vmatpush1.msra.mxu0 %v59
    %210 = vmatprep.subr.mxu0 %v56
    %211 = vmatpush1.msra.mxu0 %v55
    %212 = vmatprep.subr.mxu0 %v52
    %213 = vmatpush1.msra.mxu0 %v51
    %214 = vmatprep.subr.mxu0 %v48
    %215 = vmatpush1.msra.mxu0 %v47
    %216 = vmatprep.subr.mxu0 %v44
    %217 = vmatpush1.msra.mxu0 %v43
    %218 = vmatprep.subr.mxu0 %v40
    %219 = vmatpush1.msra.mxu0 %v39
    %220 = vmatprep.subr.mxu0 %v36
    %221 = vmatpush1.msra.mxu0 %v35
    %222 = vmatprep.subr.mxu0 0.0
    %223 = vmatpush2.msra.mxu0 0.0
    %224 = vmatprep.subr.mxu0 0.0
    %225 = vmatpush2.msra.mxu0 0.0
    %226 = vmatprep.subr.mxu0 0.0
    %227 = vmatpush2.msra.mxu0 0.0
    %228 = vmatprep.subr.mxu0 0.0
    %229 = vmatpush2.msra.mxu0 0.0
    %230 = vmatprep.subr.mxu0 0.0
    %231 = vmatpush2.msra.mxu0 0.0
    %232 = vmatprep.subr.mxu0 0.0
    %233 = vmatpush2.msra.mxu0 0.0
    %234 = vmatprep.subr.mxu0 0.0
    %235 = vmatpush2.msra.mxu0 0.0
    %236 = vmatprep.subr.mxu0 0.0
    %237 = vmatpush2.msra.mxu0 0.0
    %238 = vmatprep.subr.mxu0 0.0
    %239 = vmatpush2.msra.mxu0 0.0
    %240 = vmatprep.subr.mxu0 0.0
    %241 = vmatpush2.msra.mxu0 0.0
    %242 = vmatprep.subr.mxu0 0.0
    %243 = vmatpush2.msra.mxu0 0.0
    %244 = vmatprep.subr.mxu0 0.0
    %245 = vmatpush2.msra.mxu0 0.0
    %246 = vmatprep.subr.mxu0 0.0
    %247 = vmatpush2.msra.mxu0 0.0
    %248 = vmatprep.subr.mxu0 0.0
    %249 = vmatpush2.msra.mxu0 0.0
    %250 = vmatprep.subr.mxu0 0.0
    %251 = vmatpush2.msra.mxu0 0.0
    %252 = vmatprep.subr.mxu0 0.0
    %253 = vmatpush2.msra.mxu0 0.0
    %254 = vmatprep.mubr.f32.mxu0 0.0
    %255 = vmatmul.mubr.f32.gmra.mxu0 %v117
    %v256 = vpop.f32.mrf.mxu0
    %v257 = vadd.f32 %v106, %v256
    %v258 = vpop.f32.mrf.mxu0
    %v259 = vadd.f32 %v110, %v258
    %260 = vdwg.mxu0
    %v261 = vmul.f32 %v186, 0.16666667
    %v262 = vmul.f32 %v188, 0.16666667
    %v263 = vmul.f32 %v257, 0.16666667
    %v264 = vmul.f32 %v259, 0.16666667
    %v265 = vadd.f32 %v261, 0.5
    %v266 = vadd.f32 %v262, 0.5
    %v267 = vadd.f32 %v263, 0.5
    %v268 = vadd.f32 %v264, 0.5
    %v269 = vmax.f32 %v265, 0.0
    %v270 = vmax.f32 %v266, 0.0
    %v271 = vmax.f32 %v267, 0.0
    %v272 = vmax.f32 %v268, 0.0
    %v273 = vmin.f32 %v269, 1.0
    %v274 = vmin.f32 %v270, 1.0
    %v275 = vmin.f32 %v271, 1.0
    %v276 = vmin.f32 %v272, 1.0
    %v277 = vld [vmem:[#allocation2] sm:$0xff]
    %v278 = vld [vmem:[#allocation2 + $0x8] sm:$0xff]
    %v279 = vld [vmem:[#allocation2 + $0x10] sm:$0xff]
    %v280 = vld [vmem:[#allocation2 + $0x18] sm:$0xff]
    %v281 = vld [vmem:[#allocation2 + $0x20] sm:$0xff]
    %v282 = vld [vmem:[#allocation2 + $0x28] sm:$0xff]
    %v283 = vld [vmem:[#allocation2 + $0x30] sm:$0xff]
    %v284 = vld [vmem:[#allocation2 + $0x38] sm:$0xff]
    %v285 = vld [vmem:[#allocation2 + $0x40] sm:$0xff]
    %v286 = vld [vmem:[#allocation2 + $0x48] sm:$0xff]
    %v287 = vld [vmem:[#allocation2 + $0x50] sm:$0xff]
    %v288 = vld [vmem:[#allocation2 + $0x58] sm:$0xff]
    %v289 = vld [vmem:[#allocation2 + $0x60] sm:$0xff]
    %v290 = vld [vmem:[#allocation2 + $0x68] sm:$0xff]
    %v291 = vld [vmem:[#allocation2 + $0x70] sm:$0xff]
    %v292 = vld [vmem:[#allocation2 + $0x78] sm:$0xff]
    %v293 = vld [vmem:[#allocation2 + $0x80] sm:$0xff]
    %v294 = vld [vmem:[#allocation2 + $0x88] sm:$0xff]
    %v295 = vld [vmem:[#allocation2 + $0x90] sm:$0xff]
    %v296 = vld [vmem:[#allocation2 + $0x98] sm:$0xff]
    %v297 = vld [vmem:[#allocation2 + $0xa0] sm:$0xff]
    %v298 = vld [vmem:[#allocation2 + $0xa8] sm:$0xff]
    %v299 = vld [vmem:[#allocation2 + $0xb0] sm:$0xff]
    %v300 = vld [vmem:[#allocation2 + $0xb8] sm:$0xff]
    %v301 = vld [vmem:[#allocation2 + $0xc0] sm:$0xff]
    %v302 = vld [vmem:[#allocation2 + $0xc8] sm:$0xff]
    %v303 = vld [vmem:[#allocation2 + $0xd0] sm:$0xff]
    %v304 = vld [vmem:[#allocation2 + $0xd8] sm:$0xff]
    %v305 = vld [vmem:[#allocation2 + $0xe0] sm:$0xff]
    %v306 = vld [vmem:[#allocation2 + $0xe8] sm:$0xff]
    %v307 = vld [vmem:[#allocation2 + $0xf0] sm:$0xff]
    %v308 = vld [vmem:[#allocation2 + $0xf8] sm:$0xff]
    %v309 = vld [vmem:[#allocation2 + $0x100] sm:$0xff]
    %v310 = vld [vmem:[#allocation2 + $0x108] sm:$0xff]
    %v311 = vld [vmem:[#allocation2 + $0x110] sm:$0xff]
    %v312 = vld [vmem:[#allocation2 + $0x118] sm:$0xff]
    %v313 = vld [vmem:[#allocation2 + $0x120] sm:$0xff]
    %v314 = vld [vmem:[#allocation2 + $0x128] sm:$0xff]
    %v315 = vld [vmem:[#allocation2 + $0x130] sm:$0xff]
    %v316 = vld [vmem:[#allocation2 + $0x138] sm:$0xff]
    %v317 = vld [vmem:[#allocation2 + $0x140] sm:$0xff]
    %v318 = vld [vmem:[#allocation2 + $0x148] sm:$0xff]
    %v319 = vld [vmem:[#allocation2 + $0x150] sm:$0xff]
    %v320 = vld [vmem:[#allocation2 + $0x158] sm:$0xff]
    %v321 = vld [vmem:[#allocation2 + $0x160] sm:$0xff]
    %v322 = vld [vmem:[#allocation2 + $0x168] sm:$0xff]
    %v323 = vld [vmem:[#allocation2 + $0x170] sm:$0xff]
    %v324 = vld [vmem:[#allocation2 + $0x178] sm:$0xff]
    %v325 = vld [vmem:[#allocation2 + $0x180] sm:$0xff]
    %v326 = vld [vmem:[#allocation2 + $0x188] sm:$0xff]
    %v327 = vld [vmem:[#allocation2 + $0x190] sm:$0xff]
    %v328 = vld [vmem:[#allocation2 + $0x198] sm:$0xff]
    %v329 = vld [vmem:[#allocation2 + $0x1a0] sm:$0xff]
    %v330 = vld [vmem:[#allocation2 + $0x1a8] sm:$0xff]
    %v331 = vld [vmem:[#allocation2 + $0x1b0] sm:$0xff]
    %v332 = vld [vmem:[#allocation2 + $0x1b8] sm:$0xff]
    %v333 = vld [vmem:[#allocation2 + $0x1c0] sm:$0xff]
    %v334 = vld [vmem:[#allocation2 + $0x1c8] sm:$0xff]
    %v335 = vld [vmem:[#allocation2 + $0x1d0] sm:$0xff]
    %v336 = vld [vmem:[#allocation2 + $0x1d8] sm:$0xff]
    %v337 = vld [vmem:[#allocation2 + $0x1e0] sm:$0xff]
    %v338 = vld [vmem:[#allocation2 + $0x1e8] sm:$0xff]
    %v339 = vld [vmem:[#allocation2 + $0x1f0] sm:$0xff]
    %v340 = vld [vmem:[#allocation2 + $0x1f8] sm:$0xff]
    %v341 = vld [vmem:[#allocation2 + $0x200] sm:$0xff]
    %v342 = vld [vmem:[#allocation2 + $0x208] sm:$0xff]
    %v343 = vld [vmem:[#allocation2 + $0x210] sm:$0xff]
    %v344 = vld [vmem:[#allocation2 + $0x218] sm:$0xff]
    %v345 = vld [vmem:[#allocation2 + $0x220] sm:$0xff]
    %v346 = vld [vmem:[#allocation2 + $0x228] sm:$0xff]
    %v347 = vld [vmem:[#allocation2 + $0x230] sm:$0xff]
    %v348 = vld [vmem:[#allocation2 + $0x238] sm:$0xff]
    %v349 = vld [vmem:[#allocation2 + $0x240] sm:$0xff]
    %v350 = vld [vmem:[#allocation2 + $0x248] sm:$0xff]
    %v351 = vld [vmem:[#allocation2 + $0x250] sm:$0xff]
    %v352 = vld [vmem:[#allocation2 + $0x258] sm:$0xff]
    %v353 = vld [vmem:[#allocation2 + $0x260] sm:$0xff]
    %v354 = vld [vmem:[#allocation2 + $0x268] sm:$0xff]
    %v355 = vld [vmem:[#allocation2 + $0x270] sm:$0xff]
    %v356 = vld [vmem:[#allocation2 + $0x278] sm:$0xff]
    %v357 = vld [vmem:[#allocation2 + $0x280] sm:$0xff]
    %v358 = vld [vmem:[#allocation2 + $0x288] sm:$0xff]
    %v359 = vld [vmem:[#allocation2 + $0x290] sm:$0xff]
    %v360 = vld [vmem:[#allocation2 + $0x298] sm:$0xff]
    %v361 = vld [vmem:[#allocation2 + $0x2a0] sm:$0xff]
    %v362 = vld [vmem:[#allocation2 + $0x2a8] sm:$0xff]
    %v363 = vld [vmem:[#allocation2 + $0x2b0] sm:$0xff]
    %v364 = vld [vmem:[#allocation2 + $0x2b8] sm:$0xff]
    %v365 = vld [vmem:[#allocation2 + $0x2c0] sm:$0xff]
    %v366 = vld [vmem:[#allocation2 + $0x2c8] sm:$0xff]
    %v367 = vld [vmem:[#allocation2 + $0x2d0] sm:$0xff]
    %v368 = vld [vmem:[#allocation2 + $0x2d8] sm:$0xff]
    %v369 = vld [vmem:[#allocation2 + $0x2e0] sm:$0xff]
    %v370 = vld [vmem:[#allocation2 + $0x2e8] sm:$0xff]
    %v371 = vld [vmem:[#allocation2 + $0x2f0] sm:$0xff]
    %v372 = vld [vmem:[#allocation2 + $0x2f8] sm:$0xff]
    %v373 = vld [vmem:[#allocation2 + $0x300] sm:$0xf]
    %v374 = vld [vmem:[#allocation2 + $0x308] sm:$0xf]
    %v375 = vld [vmem:[#allocation2 + $0x310] sm:$0xf]
    %v376 = vld [vmem:[#allocation2 + $0x318] sm:$0xf]
    %v377 = vlaneseq
    %v378 = vshrl.u32 %v377, 7
    %v379 = vsub.s32 0, %v378
    %v380 = vrot.slane %v273, %v379
    %v381 = vlaneseq
    %v382 = vshrl.u32 %v381, 7
    %v383 = vsub.s32 0, %v382
    %v384 = vrot.slane %v274, %v383
    %v385 = vlaneseq
    %v386 = vshrl.u32 %v385, 7
    %v387 = vsub.s32 0, %v386
    %v388 = vrot.slane %v275, %v387
    %v389 = vlaneseq
    %v390 = vshrl.u32 %v389, 7
    %v391 = vsub.s32 0, %v390
    %v392 = vrot.slane %v276, %v391
    %v393 = vmul.f32 %v277, %v380
    %v394 = vmul.f32 %v278, %v384
    %v395 = vmul.f32 %v279, %v388
    %v396 = vmul.f32 %v280, %v392
    %v397 = vmul.f32 %v281, %v380
    %v398 = vmul.f32 %v282, %v384
    %v399 = vmul.f32 %v283, %v388
    %v400 = vmul.f32 %v284, %v392
    %v401 = vmul.f32 %v285, %v380
    %v402 = vmul.f32 %v286, %v384
    %v403 = vmul.f32 %v287, %v388
    %v404 = vmul.f32 %v288, %v392
    %v405 = vmul.f32 %v289, %v380
    %v406 = vmul.f32 %v290, %v384
    %v407 = vmul.f32 %v291, %v388
    %v408 = vmul.f32 %v292, %v392
    %v409 = vmul.f32 %v293, %v380
    %v410 = vmul.f32 %v294, %v384
    %v411 = vmul.f32 %v295, %v388
    %v412 = vmul.f32 %v296, %v392
    %v413 = vmul.f32 %v297, %v380
    %v414 = vmul.f32 %v298, %v384
    %v415 = vmul.f32 %v299, %v388
    %v416 = vmul.f32 %v300, %v392
    %v417 = vmul.f32 %v301, %v380
    %v418 = vmul.f32 %v302, %v384
    %v419 = vmul.f32 %v303, %v388
    %v420 = vmul.f32 %v304, %v392
    %v421 = vmul.f32 %v305, %v380
    %v422 = vmul.f32 %v306, %v384
    %v423 = vmul.f32 %v307, %v388
    %v424 = vmul.f32 %v308, %v392
    %v425 = vmul.f32 %v309, %v380
    %v426 = vmul.f32 %v310, %v384
    %v427 = vmul.f32 %v311, %v388
    %v428 = vmul.f32 %v312, %v392
    %v429 = vmul.f32 %v313, %v380
    %v430 = vmul.f32 %v314, %v384
    %v431 = vmul.f32 %v315, %v388
    %v432 = vmul.f32 %v316, %v392
    %v433 = vmul.f32 %v317, %v380
    %v434 = vmul.f32 %v318, %v384
    %v435 = vmul.f32 %v319, %v388
    %v436 = vmul.f32 %v320, %v392
    %v437 = vmul.f32 %v321, %v380
    %v438 = vmul.f32 %v322, %v384
    %v439 = vmul.f32 %v323, %v388
    %v440 = vmul.f32 %v324, %v392
    %v441 = vmul.f32 %v325, %v380
    %v442 = vmul.f32 %v326, %v384
    %v443 = vmul.f32 %v327, %v388
    %v444 = vmul.f32 %v328, %v392
    %v445 = vmul.f32 %v329, %v380
    %v446 = vmul.f32 %v330, %v384
    %v447 = vmul.f32 %v331, %v388
    %v448 = vmul.f32 %v332, %v392
    %v449 = vmul.f32 %v333, %v380
    %v450 = vmul.f32 %v334, %v384
    %v451 = vmul.f32 %v335, %v388
    %v452 = vmul.f32 %v336, %v392
    %v453 = vmul.f32 %v337, %v380
    %v454 = vmul.f32 %v338, %v384
    %v455 = vmul.f32 %v339, %v388
    %v456 = vmul.f32 %v340, %v392
    %v457 = vmul.f32 %v341, %v380
    %v458 = vmul.f32 %v342, %v384
    %v459 = vmul.f32 %v343, %v388
    %v460 = vmul.f32 %v344, %v392
    %v461 = vmul.f32 %v345, %v380
    %v462 = vmul.f32 %v346, %v384
    %v463 = vmul.f32 %v347, %v388
    %v464 = vmul.f32 %v348, %v392
    %v465 = vmul.f32 %v349, %v380
    %v466 = vmul.f32 %v350, %v384
    %v467 = vmul.f32 %v351, %v388
    %v468 = vmul.f32 %v352, %v392
    %v469 = vmul.f32 %v353, %v380
    %v470 = vmul.f32 %v354, %v384
    %v471 = vmul.f32 %v355, %v388
    %v472 = vmul.f32 %v356, %v392
    %v473 = vmul.f32 %v357, %v380
    %v474 = vmul.f32 %v358, %v384
    %v475 = vmul.f32 %v359, %v388
    %v476 = vmul.f32 %v360, %v392
    %v477 = vmul.f32 %v361, %v380
    %v478 = vmul.f32 %v362, %v384
    %v479 = vmul.f32 %v363, %v388
    %v480 = vmul.f32 %v364, %v392
    %v481 = vmul.f32 %v365, %v380
    %v482 = vmul.f32 %v366, %v384
    %v483 = vmul.f32 %v367, %v388
    %v484 = vmul.f32 %v368, %v392
    %v485 = vmul.f32 %v369, %v380
    %v486 = vmul.f32 %v370, %v384
    %v487 = vmul.f32 %v371, %v388
    %v488 = vmul.f32 %v372, %v392
    %v489 = vmul.f32 %v373, %v380
    %v490 = vmul.f32 %v374, %v384
    %v491 = vmul.f32 %v375, %v388
    %v492 = vmul.f32 %v376, %v392
    %493 = vst [vmem:[#allocation5] sm:$0xff] %v393
    %494 = vst [vmem:[#allocation5 + $0x8] sm:$0xff] %v394
    %495 = vst [vmem:[#allocation5 + $0x10] sm:$0xff] %v395
    %vm496 = vcmask 785408
    %497 = vst.msk [vmem:[#allocation5 + $0x18] sm:$0xff] %vm496, %v396
    %498 = vst [vmem:[#allocation5 + $0x20] sm:$0xff] %v397
    %499 = vst [vmem:[#allocation5 + $0x28] sm:$0xff] %v398
    %500 = vst [vmem:[#allocation5 + $0x30] sm:$0xff] %v399
    %501 = vst.msk [vmem:[#allocation5 + $0x38] sm:$0xff] %vm496, %v400
    %502 = vst [vmem:[#allocation5 + $0x40] sm:$0xff] %v401
    %503 = vst [vmem:[#allocation5 + $0x48] sm:$0xff] %v402
    %504 = vst [vmem:[#allocation5 + $0x50] sm:$0xff] %v403
    %505 = vst.msk [vmem:[#allocation5 + $0x58] sm:$0xff] %vm496, %v404
    %506 = vst [vmem:[#allocation5 + $0x60] sm:$0xff] %v405
    %507 = vst [vmem:[#allocation5 + $0x68] sm:$0xff] %v406
    %508 = vst [vmem:[#allocation5 + $0x70] sm:$0xff] %v407
    %509 = vst.msk [vmem:[#allocation5 + $0x78] sm:$0xff] %vm496, %v408
    %510 = vst [vmem:[#allocation5 + $0x80] sm:$0xff] %v409
    %511 = vst [vmem:[#allocation5 + $0x88] sm:$0xff] %v410
    %512 = vst [vmem:[#allocation5 + $0x90] sm:$0xff] %v411
    %513 = vst.msk [vmem:[#allocation5 + $0x98] sm:$0xff] %vm496, %v412
    %514 = vst [vmem:[#allocation5 + $0xa0] sm:$0xff] %v413
    %515 = vst [vmem:[#allocation5 + $0xa8] sm:$0xff] %v414
    %516 = vst [vmem:[#allocation5 + $0xb0] sm:$0xff] %v415
    %517 = vst.msk [vmem:[#allocation5 + $0xb8] sm:$0xff] %vm496, %v416
    %518 = vst [vmem:[#allocation5 + $0xc0] sm:$0xff] %v417
    %519 = vst [vmem:[#allocation5 + $0xc8] sm:$0xff] %v418
    %520 = vst [vmem:[#allocation5 + $0xd0] sm:$0xff] %v419
    %521 = vst.msk [vmem:[#allocation5 + $0xd8] sm:$0xff] %vm496, %v420
    %522 = vst [vmem:[#allocation5 + $0xe0] sm:$0xff] %v421
    %523 = vst [vmem:[#allocation5 + $0xe8] sm:$0xff] %v422
    %524 = vst [vmem:[#allocation5 + $0xf0] sm:$0xff] %v423
    %525 = vst.msk [vmem:[#allocation5 + $0xf8] sm:$0xff] %vm496, %v424
    %526 = vst [vmem:[#allocation5 + $0x100] sm:$0xff] %v425
    %527 = vst [vmem:[#allocation5 + $0x108] sm:$0xff] %v426
    %528 = vst [vmem:[#allocation5 + $0x110] sm:$0xff] %v427
    %529 = vst.msk [vmem:[#allocation5 + $0x118] sm:$0xff] %vm496, %v428
    %530 = vst [vmem:[#allocation5 + $0x120] sm:$0xff] %v429
    %531 = vst [vmem:[#allocation5 + $0x128] sm:$0xff] %v430
    %532 = vst [vmem:[#allocation5 + $0x130] sm:$0xff] %v431
    %533 = vst.msk [vmem:[#allocation5 + $0x138] sm:$0xff] %vm496, %v432
    %534 = vst [vmem:[#allocation5 + $0x140] sm:$0xff] %v433
    %535 = vst [vmem:[#allocation5 + $0x148] sm:$0xff] %v434
    %536 = vst [vmem:[#allocation5 + $0x150] sm:$0xff] %v435
    %537 = vst.msk [vmem:[#allocation5 + $0x158] sm:$0xff] %vm496, %v436
    %538 = vst [vmem:[#allocation5 + $0x160] sm:$0xff] %v437
    %539 = vst [vmem:[#allocation5 + $0x168] sm:$0xff] %v438
    %540 = vst [vmem:[#allocation5 + $0x170] sm:$0xff] %v439
    %541 = vst.msk [vmem:[#allocation5 + $0x178] sm:$0xff] %vm496, %v440
    %542 = vst [vmem:[#allocation5 + $0x180] sm:$0xff] %v441
    %543 = vst [vmem:[#allocation5 + $0x188] sm:$0xff] %v442
    %544 = vst [vmem:[#allocation5 + $0x190] sm:$0xff] %v443
    %545 = vst.msk [vmem:[#allocation5 + $0x198] sm:$0xff] %vm496, %v444
    %546 = vst [vmem:[#allocation5 + $0x1a0] sm:$0xff] %v445
    %547 = vst [vmem:[#allocation5 + $0x1a8] sm:$0xff] %v446
    %548 = vst [vmem:[#allocation5 + $0x1b0] sm:$0xff] %v447
    %549 = vst.msk [vmem:[#allocation5 + $0x1b8] sm:$0xff] %vm496, %v448
    %550 = vst [vmem:[#allocation5 + $0x1c0] sm:$0xff] %v449
    %551 = vst [vmem:[#allocation5 + $0x1c8] sm:$0xff] %v450
    %552 = vst [vmem:[#allocation5 + $0x1d0] sm:$0xff] %v451
    %553 = vst.msk [vmem:[#allocation5 + $0x1d8] sm:$0xff] %vm496, %v452
    %554 = vst [vmem:[#allocation5 + $0x1e0] sm:$0xff] %v453
    %555 = vst [vmem:[#allocation5 + $0x1e8] sm:$0xff] %v454
    %556 = vst [vmem:[#allocation5 + $0x1f0] sm:$0xff] %v455
    %557 = vst.msk [vmem:[#allocation5 + $0x1f8] sm:$0xff] %vm496, %v456
    %558 = vst [vmem:[#allocation5 + $0x200] sm:$0xff] %v457
    %559 = vst [vmem:[#allocation5 + $0x208] sm:$0xff] %v458
    %560 = vst [vmem:[#allocation5 + $0x210] sm:$0xff] %v459
    %561 = vst.msk [vmem:[#allocation5 + $0x218] sm:$0xff] %vm496, %v460
    %562 = vst [vmem:[#allocation5 + $0x220] sm:$0xff] %v461
    %563 = vst [vmem:[#allocation5 + $0x228] sm:$0xff] %v462
    %564 = vst [vmem:[#allocation5 + $0x230] sm:$0xff] %v463
    %565 = vst.msk [vmem:[#allocation5 + $0x238] sm:$0xff] %vm496, %v464
    %566 = vst [vmem:[#allocation5 + $0x240] sm:$0xff] %v465
    %567 = vst [vmem:[#allocation5 + $0x248] sm:$0xff] %v466
    %568 = vst [vmem:[#allocation5 + $0x250] sm:$0xff] %v467
    %569 = vst.msk [vmem:[#allocation5 + $0x258] sm:$0xff] %vm496, %v468
    %570 = vst [vmem:[#allocation5 + $0x260] sm:$0xff] %v469
    %571 = vst [vmem:[#allocation5 + $0x268] sm:$0xff] %v470
    %572 = vst [vmem:[#allocation5 + $0x270] sm:$0xff] %v471
    %573 = vst.msk [vmem:[#allocation5 + $0x278] sm:$0xff] %vm496, %v472
    %574 = vst [vmem:[#allocation5 + $0x280] sm:$0xff] %v473
    %575 = vst [vmem:[#allocation5 + $0x288] sm:$0xff] %v474
    %576 = vst [vmem:[#allocation5 + $0x290] sm:$0xff] %v475
    %577 = vst.msk [vmem:[#allocation5 + $0x298] sm:$0xff] %vm496, %v476
    %578 = vst [vmem:[#allocation5 + $0x2a0] sm:$0xff] %v477
    %579 = vst [vmem:[#allocation5 + $0x2a8] sm:$0xff] %v478
    %580 = vst [vmem:[#allocation5 + $0x2b0] sm:$0xff] %v479
    %581 = vst.msk [vmem:[#allocation5 + $0x2b8] sm:$0xff] %vm496, %v480
    %582 = vst [vmem:[#allocation5 + $0x2c0] sm:$0xff] %v481
    %583 = vst [vmem:[#allocation5 + $0x2c8] sm:$0xff] %v482
    %584 = vst [vmem:[#allocation5 + $0x2d0] sm:$0xff] %v483
    %585 = vst.msk [vmem:[#allocation5 + $0x2d8] sm:$0xff] %vm496, %v484
    %586 = vst [vmem:[#allocation5 + $0x2e0] sm:$0xff] %v485
    %587 = vst [vmem:[#allocation5 + $0x2e8] sm:$0xff] %v486
    %588 = vst [vmem:[#allocation5 + $0x2f0] sm:$0xff] %v487
    %589 = vst.msk [vmem:[#allocation5 + $0x2f8] sm:$0xff] %vm496, %v488
    %590 = vst [vmem:[#allocation5 + $0x300] sm:$0xf] %v489
    %591 = vst [vmem:[#allocation5 + $0x308] sm:$0xf] %v490
    %592 = vst [vmem:[#allocation5 + $0x310] sm:$0xf] %v491
    %vm593 = vcmask 781312
    %594 = vst.msk [vmem:[#allocation5 + $0x318] sm:$0xf] %vm593, %v492
    // Predicated region
    $region22: #{tpu_custom_call.1} parent=1 // pred_check
      _
    $region23: #{tpu_custom_call.1} parent=1 // pred_check_branch
      %596 = sbr.rel (0) target = $region25
    $region24: #{tpu_custom_call.1} parent=1 // pred_region
      %s598 = ssub.s32 12800, 12800
      %599 = vsyncadd [#allocation4], %s598
      %s600 = sshll.u32 [#allocation5], 4
      %s601 = int_to_ptr.vmem [resolvable:$true] %s600
      %606 = dma.vmem_to_hbm [thread:$0]  %s601, 12800, %s4, [#allocation4], 512, 512, 32
    $region25: #{tpu_custom_call.1} parent=1 // pred_fallthru
      _
    // Predicated region
    $region26: #{tpu_custom_call.1} parent=1 // pred_check
      _
    $region27: #{tpu_custom_call.1} parent=1 // pred_check_branch
      %608 = sbr.rel (0) target = $region29
    $region28: #{tpu_custom_call.1} parent=1 // pred_region
      %609 = dma.done [#allocation4], 12800
    $region29: #{tpu_custom_call.1} parent=1 // pred_fallthru
      _
    %610 = vsyncpa [#allocation3], 1
    %611 = vsyncpa [#allocation4], 1

</llo_original>
